<compile_context>
chip_gen: v7x
topology: tpu7x:2x2x1
jax: 0.10.0
libtpu: 0.0.40
codegen_flags: <defaults>
</compile_context>

<pallas_src>
import math
from typing import NamedTuple

import jax
import jax.numpy as jnp
from jax.experimental import pallas as pl
from jax.experimental.pallas import tpu as pltpu


def _round_up(x, m):
    return ((x + m - 1) // m) * m


class FusedPredictorParams(NamedTuple):
    w_fused: jax.Array   # (C, kc_pad + kb_pad) bf16: [W_cls | 0 | W_bbox | 0]
    b_fused: jax.Array   # (1, kc_pad + kb_pad) f32
    num_classes: int
    num_bbox: int
    kc_pad: int
    kb_pad: int


def prepare_fused_params(w_cls, b_cls, w_bbox, b_bbox):
    """One-time weight fusion (hoisted out of the per-forward path).

    w_cls:  (C, num_classes)          (pre-transposed vs PyTorch's (out, in))
    b_cls:  (num_classes,)
    w_bbox: (C, num_classes * 4)
    b_bbox: (num_classes * 4,)
    """
    c, num_classes = w_cls.shape
    num_bbox = w_bbox.shape[1]
    kc_pad = _round_up(num_classes, 128)   # lane-dense per-head widths
    kb_pad = _round_up(num_bbox, 128)
    k_pad = kc_pad + kb_pad

    w_fused = jnp.zeros((c, k_pad), jnp.bfloat16)
    w_fused = w_fused.at[:, :num_classes].set(w_cls.astype(jnp.bfloat16))
    w_fused = w_fused.at[:, kc_pad:kc_pad + num_bbox].set(
        w_bbox.astype(jnp.bfloat16))

    b_fused = jnp.zeros((1, k_pad), jnp.float32)
    b_fused = b_fused.at[0, :num_classes].set(b_cls.astype(jnp.float32))
    b_fused = b_fused.at[0, kc_pad:kc_pad + num_bbox].set(
        b_bbox.astype(jnp.float32))

    return FusedPredictorParams(w_fused, b_fused, num_classes, num_bbox,
                                kc_pad, kb_pad)


def _fused_head_kernel(x_ref, w_ref, b_ref, scores_ref, deltas_ref):
    """[scores | deltas] = bf16(x) @ [W_cls | W_bbox] (f32 accumulate) + bias."""
    x_bf16 = x_ref[...].astype(jnp.bfloat16)          # in-kernel cast (VPU)
    acc = jnp.dot(x_bf16, w_ref[...], preferred_element_type=jnp.float32)
    acc = acc + b_ref[...]                            # bias added in f32
    kc = scores_ref.shape[-1]                         # static, 128-aligned split
    scores_ref[...] = acc[:, :kc].astype(scores_ref.dtype)
    deltas_ref[...] = acc[:, kc:].astype(deltas_ref.dtype)


def fast_rcnn_predictor(x, params: FusedPredictorParams, *, row_tile=256):
    """JAX wrapper matching FastRCNNPredictor.forward.

    x: (N, C) or (N, C, 1, 1); params from prepare_fused_params().
    Returns (scores, bbox_deltas) with exact logical shapes.
    """
    if x.ndim == 4:
        assert list(x.shape[2:]) == [1, 1], "expected (N, C, 1, 1) input"
    x2d = x.reshape(x.shape[0], -1)                   # flatten(start_dim=1)

    n, c = x2d.shape
    w_fused, b_fused, num_classes, num_bbox, kc_pad, kb_pad = params
    assert w_fused.shape[0] == c, "in_channels mismatch with fused weights"
    k_pad = kc_pad + kb_pad
    # TODO(synk): emit bf16 outputs if downstream softmax / box decode tolerates it.
    out_dtype = x2d.dtype

    # Row tile: multiple of 8 sublanes; grid uses the masked boundary block
    # (no jnp.pad copy of x).
    tm = min(row_tile, _round_up(n, 8))
    grid = (pl.cdiv(n, tm),)

    itemsize_x = jnp.dtype(x2d.dtype).itemsize
    itemsize_o = jnp.dtype(out_dtype).itemsize
    cost = pl.CostEstimate(
        flops=2 * n * c * k_pad,
        transcendentals=0,
        bytes_accessed=(x2d.size * itemsize_x + w_fused.size * 2
                        + b_fused.size * 4 + n * k_pad * itemsize_o),
    )

    def run(single_buffer_resident):
        if single_buffer_resident:
            # Constant index maps -> never re-fetched; one buffer is enough.
            w_spec = pl.BlockSpec((c, k_pad), lambda i: (0, 0),
                                  pipeline_mode=pl.Buffered(1))
            b_spec = pl.BlockSpec((1, k_pad), lambda i: (0, 0),
                                  pipeline_mode=pl.Buffered(1))
        else:
            w_spec = pl.BlockSpec((c, k_pad), lambda i: (0, 0))
            b_spec = pl.BlockSpec((1, k_pad), lambda i: (0, 0))
        return pl.pallas_call(
            _fused_head_kernel,
            out_shape=(jax.ShapeDtypeStruct((n, kc_pad), out_dtype),
                       jax.ShapeDtypeStruct((n, kb_pad), out_dtype)),
            grid=grid,
            in_specs=[
                pl.BlockSpec((tm, c), lambda i: (i, 0)),   # x tile: streams over N
                w_spec,                                    # fused weight: resident
                b_spec,                                    # fused bias:   resident
            ],
            out_specs=(
                pl.BlockSpec((tm, kc_pad), lambda i: (i, 0)),  # lane-dense scores
                pl.BlockSpec((tm, kb_pad), lambda i: (i, 0)),  # lane-dense deltas
            ),
            compiler_params=pltpu.CompilerParams(
                dimension_semantics=("parallel",),
            ),
            cost_estimate=cost,
        )(x2d, w_fused, b_fused)

    try:
        scores_pad, deltas_pad = run(True)
    except Exception:
        # Fallback if single-buffering via pl.Buffered(1) is unsupported here.
        scores_pad, deltas_pad = run(False)

    # Final crop to the exact logical widths (small, per-head, lane-aligned
    # source).  Consumers that can index into the 128-lane-padded per-head
    # outputs should take scores_pad / deltas_pad directly and skip this.
    scores = scores_pad[:, :num_classes]
    bbox_deltas = deltas_pad[:, :num_bbox]
    return scores, bbox_deltas


def init_params(key, in_channels, num_classes, dtype=jnp.float32):
    """Deterministic init mimicking nn.Linear default (uniform +-1/sqrt(in))."""
    k1, k2, k3, k4 = jax.random.split(key, 4)
    bound = 1.0 / math.sqrt(in_channels)
    w_cls = jax.random.uniform(k1, (in_channels, num_classes), dtype,
                               minval=-bound, maxval=bound)
    b_cls = jax.random.uniform(k2, (num_classes,), dtype,
                               minval=-bound, maxval=bound)
    w_bbox = jax.random.uniform(k3, (in_channels, num_classes * 4), dtype,
                                minval=-bound, maxval=bound)
    b_bbox = jax.random.uniform(k4, (num_classes * 4,), dtype,
                                minval=-bound, maxval=bound)
    return w_cls, b_cls, w_bbox, b_bbox


if __name__ == "__main__":
    key = jax.random.PRNGKey(0)
    kx, kp = jax.random.split(key)

    batch = 8           # number of RoIs
    in_channels = 32    # representation size
    num_classes = 5     # including background

    # Input as it comes out of the box head (N, C, 1, 1), NCHW.
    x = jax.random.normal(kx, (batch, in_channels, 1, 1), jnp.float32)

    w_cls, b_cls, w_bbox, b_bbox = init_params(kp, in_channels, num_classes)

    # One-time weight fusion, hoisted out of the per-forward path.
    params = prepare_fused_params(w_cls, b_cls, w_bbox, b_bbox)
    jax.block_until_ready((params.w_fused, params.b_fused))

    scores, bbox_deltas = fast_rcnn_predictor(x, params)
    jax.block_until_ready((scores, bbox_deltas))

    # Pure-JAX reference (same bf16 quantization of x / weights as the kernel).
    x2d = x.reshape(batch, -1)
    xb = x2d.astype(jnp.bfloat16).astype(jnp.float32)
    wcb = w_cls.astype(jnp.bfloat16).astype(jnp.float32)
    wbb = w_bbox.astype(jnp.bfloat16).astype(jnp.float32)
    ref_scores = xb @ wcb + b_cls
    ref_bbox = xb @ wbb + b_bbox

    assert scores.shape == (batch, num_classes)
    assert bbox_deltas.shape == (batch, num_classes * 4)
    assert jnp.allclose(scores, ref_scores, atol=1e-3, rtol=1e-3)
    assert jnp.allclose(bbox_deltas, ref_bbox, atol=1e-3, rtol=1e-3)

    # Loose check against the full-f32 reference (bf16 quantization error only).
    assert jnp.allclose(scores, x2d @ w_cls + b_cls, atol=5e-2, rtol=5e-2)
    assert jnp.allclose(bbox_deltas, x2d @ w_bbox + b_bbox, atol=5e-2, rtol=5e-2)

    print("KERNEL_OK")
</pallas_src>

<mosaic_0001>
module attributes {stable_mosaic.version = 11 : i64} {
  func.func @_fused_head_kernel(%arg0: i32, %arg1: memref<8x32xf32, #tpu.memory_space<vmem>>, %arg2: memref<32x256xbf16, #tpu.memory_space<vmem>>, %arg3: memref<1x256xf32, #tpu.memory_space<vmem>>, %arg4: memref<8x128xf32, #tpu.memory_space<vmem>>, %arg5: memref<8x128xf32, #tpu.memory_space<vmem>>) attributes {dimension_semantics = [#tpu.dimension_semantics<parallel>], iteration_bounds = array<i64: 1>, scalar_prefetch = 0 : i64, scratch_operands = 0 : i64, tpu.core_type = #tpu.core_type<tc>, window_params = [{transform_indices = @transform_0, window_bounds = array<i64: 8, 32>}, {pipeline_mode = #tpu.pipeline_mode<synchronous>, transform_indices = @transform_1, window_bounds = array<i64: 32, 256>}, {pipeline_mode = #tpu.pipeline_mode<synchronous>, transform_indices = @transform_2, window_bounds = array<i64: 1, 256>}, {transform_indices = @transform_3, window_bounds = array<i64: 8, 128>}, {transform_indices = @transform_4, window_bounds = array<i64: 8, 128>}]} {
    %c0 = arith.constant 0 : index
    %c0_0 = arith.constant 0 : index
    %0 = vector.load %arg1[%c0, %c0_0] : memref<8x32xf32, #tpu.memory_space<vmem>>, vector<8x32xf32>
    %1 = arith.truncf %0 : vector<8x32xf32> to vector<8x32xbf16>
    %c0_1 = arith.constant 0 : index
    %c0_2 = arith.constant 0 : index
    %2 = vector.load %arg2[%c0_1, %c0_2] : memref<32x256xbf16, #tpu.memory_space<vmem>>, vector<32x256xbf16>
    %cst = arith.constant dense<0.000000e+00> : vector<8x256xf32>
    %3 = tpu.matmul %1, %2, %cst {dimension_numbers = #tpu.dot_dimension_numbers<[1], [0], [0], [1], [0, 0, 1, 1], [], []>} : vector<8x32xbf16>, vector<32x256xbf16>, vector<8x256xf32> -> vector<8x256xf32>
    %c0_3 = arith.constant 0 : index
    %c0_4 = arith.constant 0 : index
    %4 = vector.load %arg3[%c0_3, %c0_4] : memref<1x256xf32, #tpu.memory_space<vmem>>, vector<1x256xf32>
    %5 = vector.broadcast %4 : vector<1x256xf32> to vector<8x256xf32>
    %6 = arith.addf %3, %5 : vector<8x256xf32>
    %7 = vector.extract_strided_slice %6 {offsets = [0, 0], sizes = [8, 128], strides = [1, 1]} : vector<8x256xf32> to vector<8x128xf32>
    %c0_5 = arith.constant 0 : index
    %c0_6 = arith.constant 0 : index
    %8 = vector.load %arg4[%c0_5, %c0_6] : memref<8x128xf32, #tpu.memory_space<vmem>>, vector<8x128xf32>
    tpu.vector_store %arg4[%c0_5, %c0_6], %7 {strides = array<i32>} : memref<8x128xf32, #tpu.memory_space<vmem>>, vector<8x128xf32>,
    %9 = vector.extract_strided_slice %6 {offsets = [0, 128], sizes = [8, 128], strides = [1, 1]} : vector<8x256xf32> to vector<8x128xf32>
    %c0_7 = arith.constant 0 : index
    %c0_8 = arith.constant 0 : index
    %10 = vector.load %arg5[%c0_7, %c0_8] : memref<8x128xf32, #tpu.memory_space<vmem>>, vector<8x128xf32>
    tpu.vector_store %arg5[%c0_7, %c0_8], %9 {strides = array<i32>} : memref<8x128xf32, #tpu.memory_space<vmem>>, vector<8x128xf32>,
    return
  }
  func.func @transform_0(%arg0: i32) -> (i32, i32) {
    %c0_i32 = arith.constant 0 : i32
    %c0_i32_0 = arith.constant 0 : i32
    return %arg0, %c0_i32 : i32, i32
  }
  func.func @transform_1(%arg0: i32) -> (i32, i32) {
    %c0_i32 = arith.constant 0 : i32
    %c0_i32_0 = arith.constant 0 : i32
    %c0_i32_1 = arith.constant 0 : i32
    return %c0_i32, %c0_i32_0 : i32, i32
  }
  func.func @transform_2(%arg0: i32) -> (i32, i32) {
    %c0_i32 = arith.constant 0 : i32
    %c0_i32_0 = arith.constant 0 : i32
    %c0_i32_1 = arith.constant 0 : i32
    return %c0_i32, %c0_i32_0 : i32, i32
  }
  func.func @transform_3(%arg0: i32) -> (i32, i32) {
    %c0_i32 = arith.constant 0 : i32
    %c0_i32_0 = arith.constant 0 : i32
    return %arg0, %c0_i32 : i32, i32
  }
  func.func @transform_4(%arg0: i32) -> (i32, i32) {
    %c0_i32 = arith.constant 0 : i32
    %c0_i32_0 = arith.constant 0 : i32
    return %arg0, %c0_i32 : i32, i32
  }
}

module attributes {stable_mosaic.version = 11 : i64} {
  func.func @_fused_head_kernel(%arg0: i32, %arg1: memref<8x32xf32, #tpu.memory_space<vmem>>, %arg2: memref<32x256xbf16, #tpu.memory_space<vmem>>, %arg3: memref<1x256xf32, #tpu.memory_space<vmem>>, %arg4: memref<8x128xf32, #tpu.memory_space<vmem>>, %arg5: memref<8x128xf32, #tpu.memory_space<vmem>>) attributes {dimension_semantics = [#tpu.dimension_semantics<parallel>], iteration_bounds = array<i64: 1>, scalar_prefetch = 0 : i64, scratch_operands = 0 : i64, tpu.core_type = #tpu.core_type<tc>, window_params = [{transform_indices = @transform_0, window_bounds = array<i64: 8, 32>}, {pipeline_mode = #tpu.pipeline_mode<synchronous>, transform_indices = @transform_1, window_bounds = array<i64: 32, 256>}, {pipeline_mode = #tpu.pipeline_mode<synchronous>, transform_indices = @transform_2, window_bounds = array<i64: 1, 256>}, {transform_indices = @transform_3, window_bounds = array<i64: 8, 128>}, {transform_indices = @transform_4, window_bounds = array<i64: 8, 128>}]} {
    %c0 = arith.constant 0 : index
    %c0_0 = arith.constant 0 : index
    %0 = vector.load %arg1[%c0, %c0_0] : memref<8x32xf32, #tpu.memory_space<vmem>>, vector<8x32xf32>
    %1 = arith.truncf %0 : vector<8x32xf32> to vector<8x32xbf16>
    %c0_1 = arith.constant 0 : index
    %c0_2 = arith.constant 0 : index
    %2 = vector.load %arg2[%c0_1, %c0_2] : memref<32x256xbf16, #tpu.memory_space<vmem>>, vector<32x256xbf16>
    %cst = arith.constant dense<0.000000e+00> : vector<8x256xf32>
    %3 = tpu.matmul %1, %2, %cst {dimension_numbers = #tpu.dot_dimension_numbers<[1], [0], [0], [1], [0, 0, 1, 1], [], []>} : vector<8x32xbf16>, vector<32x256xbf16>, vector<8x256xf32> -> vector<8x256xf32>
    %c0_3 = arith.constant 0 : index
    %c0_4 = arith.constant 0 : index
    %4 = vector.load %arg3[%c0_3, %c0_4] : memref<1x256xf32, #tpu.memory_space<vmem>>, vector<1x256xf32>
    %5 = vector.broadcast %4 : vector<1x256xf32> to vector<8x256xf32>
    %6 = arith.addf %3, %5 : vector<8x256xf32>
    %7 = vector.extract_strided_slice %6 {offsets = [0, 0], sizes = [8, 128], strides = [1, 1]} : vector<8x256xf32> to vector<8x128xf32>
    %c0_5 = arith.constant 0 : index
    %c0_6 = arith.constant 0 : index
    %8 = vector.load %arg4[%c0_5, %c0_6] : memref<8x128xf32, #tpu.memory_space<vmem>>, vector<8x128xf32>
    tpu.vector_store %arg4[%c0_5, %c0_6], %7 {strides = array<i32>} : memref<8x128xf32, #tpu.memory_space<vmem>>, vector<8x128xf32>,
    %9 = vector.extract_strided_slice %6 {offsets = [0, 128], sizes = [8, 128], strides = [1, 1]} : vector<8x256xf32> to vector<8x128xf32>
    %c0_7 = arith.constant 0 : index
    %c0_8 = arith.constant 0 : index
    %10 = vector.load %arg5[%c0_7, %c0_8] : memref<8x128xf32, #tpu.memory_space<vmem>>, vector<8x128xf32>
    tpu.vector_store %arg5[%c0_7, %c0_8], %9 {strides = array<i32>} : memref<8x128xf32, #tpu.memory_space<vmem>>, vector<8x128xf32>,
    return
  }
  func.func @transform_0(%arg0: i32) -> (i32, i32) {
    %c0_i32 = arith.constant 0 : i32
    %c0_i32_0 = arith.constant 0 : i32
    return %arg0, %c0_i32 : i32, i32
  }
  func.func @transform_1(%arg0: i32) -> (i32, i32) {
    %c0_i32 = arith.constant 0 : i32
    %c0_i32_0 = arith.constant 0 : i32
    %c0_i32_1 = arith.constant 0 : i32
    return %c0_i32, %c0_i32_0 : i32, i32
  }
  func.func @transform_2(%arg0: i32) -> (i32, i32) {
    %c0_i32 = arith.constant 0 : i32
    %c0_i32_0 = arith.constant 0 : i32
    %c0_i32_1 = arith.constant 0 : i32
    return %c0_i32, %c0_i32_0 : i32, i32
  }
  func.func @transform_3(%arg0: i32) -> (i32, i32) {
    %c0_i32 = arith.constant 0 : i32
    %c0_i32_0 = arith.constant 0 : i32
    return %arg0, %c0_i32 : i32, i32
  }
  func.func @transform_4(%arg0: i32) -> (i32, i32) {
    %c0_i32 = arith.constant 0 : i32
    %c0_i32_0 = arith.constant 0 : i32
    return %arg0, %c0_i32 : i32, i32
  }
}

</mosaic_0001>

<llo_original>
// kernel: tpu_custom_call.1
$region0: #{tpu_custom_call.1}
  #allocation0 [shape = 'u32[]', space=smem, size = 0x4, offset = 0x4, fixed_abs, tag = 'smem constant byte address 0x4 - core index']
  #allocation1 [shape = 'u32[144,128]{1,0:T(1,128)}', space=vmem, size = 0x12000, scoped, tag = 'internal scratch']
  %s0 = inlined_call_operand.hbm [shape: f32[8,32], index: 0, kind: input, shape index: {}]
  %s1 = inlined_call_operand.hbm [shape: bf16[32,256], index: 1, kind: input, shape index: {}]
  %s2 = inlined_call_operand.vmem [shape: f32[1,256], index: 2, kind: input, shape index: {}]
  %s3 = inlined_call_operand.hbm [shape: f32[8,128], index: 3, kind: output, shape index: {0}]
  %s4 = inlined_call_operand.hbm [shape: f32[8,128], index: 4, kind: output, shape index: {1}]
  %5 = xla_tuple %s3, %s4
  %s6 = sld [smem:[#allocation0]]
  $region38: #{tpu_custom_call.1} parent=0
    _
  %s8 = ssub.s32 1, %s6
  %s9 = scalar_select 0, %s8, %s6
  $region1: #{tpu_custom_call.1} parent=0
    #allocation2 [shape = 'u8[4096]{0}', space=vmem, size = 0x1000, scoped, tag = 'input window, operand 0, single buffered']
    #allocation3 [shape = 's32[1]{0}', space=sflag, size = 0x4, scoped, tag = 'scoped memory for tpu_custom_call.1']
    #allocation4 [shape = 's32[1]{0}', space=sflag, size = 0x4, scoped, tag = 'scoped memory for tpu_custom_call.1']
    #allocation5 [shape = 'u8[16384]{0}', space=vmem, size = 0x4000, scoped, tag = 'input window, operand 1, single buffered']
    #allocation6 [shape = 's32[1]{0}', space=sflag, size = 0x4, scoped, tag = 'scoped memory for tpu_custom_call.1']
    #allocation7 [shape = 'u8[4096]{0}', space=vmem, size = 0x1000, scoped, tag = 'output window, operand 0, single buffered']
    #allocation8 [shape = 'u8[4096]{0}', space=vmem, size = 0x1000, scoped, tag = 'output window, operand 1, single buffered']
    #allocation9 [shape = 's32[1]{0}', space=sflag, size = 0x4, scoped, tag = 'scoped memory for tpu_custom_call.1']
    %10 = vsyncpa [#allocation3], 0
    %11 = vsyncpa [#allocation6], 0
    %12 = vsyncpa [#allocation4], 0
    %13 = vsyncpa [#allocation9], 0
    // Predicated region
    $region2: #{tpu_custom_call.1} parent=1 // pred_check
      _
    $region3: #{tpu_custom_call.1} parent=1 // pred_check_branch
      %15 = sbr.rel (0) target = $region5
    $region4: #{tpu_custom_call.1} parent=1 // pred_region
      %s17 = ssub.s32 128, 128
      %18 = vsyncadd [#allocation3], %s17
      %s20 = sshll.u32 [#allocation2], 4
      %s21 = int_to_ptr.vmem [resolvable:$true] %s20
      %23 = dma.hbm_to_vmem [thread:$0]  %s0, 128, %s21, [#allocation3]
    $region5: #{tpu_custom_call.1} parent=1 // pred_fallthru
      _
    // Predicated region
    $region6: #{tpu_custom_call.1} parent=1 // pred_check
      _
    $region7: #{tpu_custom_call.1} parent=1 // pred_check_branch
      %25 = sbr.rel (0) target = $region9
    $region8: #{tpu_custom_call.1} parent=1 // pred_region
      %s27 = ssub.s32 512, 512
      %28 = vsyncadd [#allocation6], %s27
      %s29 = sshll.u32 [#allocation5], 4
      %s30 = int_to_ptr.vmem [resolvable:$true] %s29
      %35 = dma.hbm_to_vmem [thread:$0]  %s1, 512, %s30, [#allocation6], 128, 128, 8
    $region9: #{tpu_custom_call.1} parent=1 // pred_fallthru
      _
    // Predicated region
    $region10: #{tpu_custom_call.1} parent=1 // pred_check
      _
    $region11: #{tpu_custom_call.1} parent=1 // pred_check_branch
      %37 = sbr.rel (0) target = $region13
    $region12: #{tpu_custom_call.1} parent=1 // pred_region
      _
    $region13: #{tpu_custom_call.1} parent=1 // pred_fallthru
      _
    // Predicated region
    $region14: #{tpu_custom_call.1} parent=1 // pred_check
      _
    $region15: #{tpu_custom_call.1} parent=1 // pred_check_branch
      %39 = sbr.rel (0) target = $region17
    $region16: #{tpu_custom_call.1} parent=1 // pred_region
      %40 = dma.done [#allocation3], 128
    $region17: #{tpu_custom_call.1} parent=1 // pred_fallthru
      _
    // Predicated region
    $region18: #{tpu_custom_call.1} parent=1 // pred_check
      _
    $region19: #{tpu_custom_call.1} parent=1 // pred_check_branch
      %42 = sbr.rel (0) target = $region21
    $region20: #{tpu_custom_call.1} parent=1 // pred_region
      %43 = dma.done [#allocation6], 512
    $region21: #{tpu_custom_call.1} parent=1 // pred_fallthru
      _
    %v45 = vld [vmem:[#allocation2] sm:$0xff]
    %v46 = vpack.c.bf16 %v45, %v45
    %v47 = vld [vmem:[#allocation5] sm:$0xff]
    %v48 = vld [vmem:[#allocation5 + $0x8] sm:$0xff]
    %v49 = vld [vmem:[#allocation5 + $0x10] sm:$0xff]
    %v50 = vld [vmem:[#allocation5 + $0x18] sm:$0xff]
    %v51 = vld [vmem:[%s2] sm:$0x3]
    %v53 = vlaneseq
    %v54 = vshrl.u32 %v53, 7
    %v55 = vsub.s32 0, %v54
    %v56 = vrot.slane %v51, %v55
    %v57 = vlaneseq
    %v58 = vshrl.u32 %v57, 7
    %v59 = vsub.s32 1, %v58
    %v60 = vrot.slane %v51, %v59
    %v67 = vunpack.c.l.b16 %v47
    %v68 = vunpack.c.h.b16 %v47
    %v69 = vunpack.c.l.b16 %v48
    %v70 = vunpack.c.h.b16 %v48
    %v71 = vunpack.c.l.b16 %v49
    %v72 = vunpack.c.h.b16 %v49
    %v73 = vunpack.c.l.b16 %v50
    %v74 = vunpack.c.h.b16 %v50
    %v75 = vpack.c.b16 %v69, %v67
    %v76 = vpack.c.b16 %v70, %v68
    %v77 = vpack.c.b16 %v73, %v71
    %v78 = vpack.c.b16 %v74, %v72
    %vm83 = vcmask 261120
    %v85 = vsel %vm83, %v46, 0
    %87 = vmatprep.subr.bf16.mxu0 %v76
    %88 = vmatpush1.bf16.msra.mxu0 %v75
    %89 = vmatprep.subr.bf16.mxu0 %v78
    %90 = vmatpush1.bf16.msra.mxu0 %v77
    %91 = vmatprep.subr.bf16.mxu0 0
    %92 = vmatpush1.bf16.msra.mxu0 0
    %93 = vmatprep.subr.bf16.mxu0 0
    %94 = vmatpush1.bf16.msra.mxu0 0
    %95 = vmatprep.subr.bf16.mxu0 0
    %96 = vmatpush1.bf16.msra.mxu0 0
    %97 = vmatprep.subr.bf16.mxu0 0
    %98 = vmatpush1.bf16.msra.mxu0 0
    %99 = vmatprep.subr.bf16.mxu0 0
    %100 = vmatpush1.bf16.msra.mxu0 0
    %101 = vmatprep.subr.bf16.mxu0 0
    %102 = vmatpush1.bf16.msra.mxu0 0
    %103 = vmatprep.subr.bf16.mxu0 0
    %104 = vmatpush1.bf16.msra.mxu0 0
    %105 = vmatprep.subr.bf16.mxu0 0
    %106 = vmatpush1.bf16.msra.mxu0 0
    %107 = vmatprep.subr.bf16.mxu0 0
    %108 = vmatpush1.bf16.msra.mxu0 0
    %109 = vmatprep.subr.bf16.mxu0 0
    %110 = vmatpush1.bf16.msra.mxu0 0
    %111 = vmatprep.subr.bf16.mxu0 0
    %112 = vmatpush1.bf16.msra.mxu0 0
    %113 = vmatprep.subr.bf16.mxu0 0
    %114 = vmatpush1.bf16.msra.mxu0 0
    %115 = vmatprep.subr.bf16.mxu0 0
    %116 = vmatpush1.bf16.msra.mxu0 0
    %117 = vmatprep.subr.bf16.mxu0 0
    %118 = vmatpush1.bf16.msra.mxu0 0
    %119 = vmatprep.mubr.bf16.mxu0 0
    %120 = vmatmul.mubr.bf16.gmra.mrb[0].mxu0 %v85
    %v121 = vpop.f32.mrb[0].mxu0
    %v122 = vadd.f32 %v56, %v121
    %v123 = vpop.f32.mrb[0].mxu0
    %v124 = vadd.f32 %v60, %v123
    %v125 = vpop.f32.mrb[0].mxu0
    %v126 = vpop.f32.mrb[0].mxu0
    %127 = vdwg.mxu0
    %128 = vst [vmem:[#allocation7] sm:$0xff] %v122
    %129 = vst [vmem:[#allocation8] sm:$0xff] %v124
    // Predicated region
    $region22: #{tpu_custom_call.1} parent=1 // pred_check
      _
    $region23: #{tpu_custom_call.1} parent=1 // pred_check_branch
      %131 = sbr.rel (0) target = $region25
    $region24: #{tpu_custom_call.1} parent=1 // pred_region
      %s133 = ssub.s32 128, 128
      %134 = vsyncadd [#allocation4], %s133
      %s136 = sshll.u32 [#allocation7], 4
      %s137 = int_to_ptr.vmem [resolvable:$true] %s136
      %139 = dma.vmem_to_hbm [thread:$0]  %s137, 128, %s3, [#allocation4]
    $region25: #{tpu_custom_call.1} parent=1 // pred_fallthru
      _
    // Predicated region
    $region26: #{tpu_custom_call.1} parent=1 // pred_check
      _
    $region27: #{tpu_custom_call.1} parent=1 // pred_check_branch
      %141 = sbr.rel (0) target = $region29
    $region28: #{tpu_custom_call.1} parent=1 // pred_region
      %s143 = ssub.s32 128, 128
      %144 = vsyncadd [#allocation9], %s143
      %s146 = sshll.u32 [#allocation8], 4
      %s147 = int_to_ptr.vmem [resolvable:$true] %s146
      %149 = dma.vmem_to_hbm [thread:$0]  %s147, 128, %s4, [#allocation9]
    $region29: #{tpu_custom_call.1} parent=1 // pred_fallthru
      _
    // Predicated region
    $region30: #{tpu_custom_call.1} parent=1 // pred_check
      _
    $region31: #{tpu_custom_call.1} parent=1 // pred_check_branch
      %151 = sbr.rel (0) target = $region33
    $region32: #{tpu_custom_call.1} parent=1 // pred_region
      %152 = dma.done [#allocation4], 128
    $region33: #{tpu_custom_call.1} parent=1 // pred_fallthru
      _
    // Predicated region
    $region34: #{tpu_custom_call.1} parent=1 // pred_check
      _
    $region35: #{tpu_custom_call.1} parent=1 // pred_check_branch
      %154 = sbr.rel (0) target = $region37
    $region36: #{tpu_custom_call.1} parent=1 // pred_region
      %155 = dma.done [#allocation9], 128
    $region37: #{tpu_custom_call.1} parent=1 // pred_fallthru
      _
    %156 = vsyncpa [#allocation3], 1
    %157 = vsyncpa [#allocation6], 1
    %158 = vsyncpa [#allocation4], 1
    %159 = vsyncpa [#allocation9], 1

// kernel: tpu_custom_call.1
$region0: #{tpu_custom_call.1}
  #allocation0 [shape = 'u32[]', space=smem, size = 0x4, offset = 0x4, fixed_abs, tag = 'smem constant byte address 0x4 - core index']
  #allocation1 [shape = 'u32[144,128]{1,0:T(1,128)}', space=vmem, size = 0x12000, scoped, tag = 'internal scratch']
  %s0 = inlined_call_operand.hbm [shape: f32[8,32], index: 0, kind: input, shape index: {}]
  %s1 = inlined_call_operand.hbm [shape: bf16[32,256], index: 1, kind: input, shape index: {}]
  %s2 = inlined_call_operand.vmem [shape: f32[1,256], index: 2, kind: input, shape index: {}]
  %s3 = inlined_call_operand.hbm [shape: f32[8,128], index: 3, kind: output, shape index: {0}]
  %s4 = inlined_call_operand.hbm [shape: f32[8,128], index: 4, kind: output, shape index: {1}]
  %5 = xla_tuple %s3, %s4
  %s6 = sld [smem:[#allocation0]]
  $region38: #{tpu_custom_call.1} parent=0
    _
  %s8 = ssub.s32 1, %s6
  %s9 = scalar_select 0, %s8, %s6
  $region1: #{tpu_custom_call.1} parent=0
    #allocation2 [shape = 'u8[4096]{0}', space=vmem, size = 0x1000, scoped, tag = 'input window, operand 0, single buffered']
    #allocation3 [shape = 's32[1]{0}', space=sflag, size = 0x4, scoped, tag = 'scoped memory for tpu_custom_call.1']
    #allocation4 [shape = 's32[1]{0}', space=sflag, size = 0x4, scoped, tag = 'scoped memory for tpu_custom_call.1']
    #allocation5 [shape = 'u8[16384]{0}', space=vmem, size = 0x4000, scoped, tag = 'input window, operand 1, single buffered']
    #allocation6 [shape = 's32[1]{0}', space=sflag, size = 0x4, scoped, tag = 'scoped memory for tpu_custom_call.1']
    #allocation7 [shape = 'u8[4096]{0}', space=vmem, size = 0x1000, scoped, tag = 'output window, operand 0, single buffered']
    #allocation8 [shape = 'u8[4096]{0}', space=vmem, size = 0x1000, scoped, tag = 'output window, operand 1, single buffered']
    #allocation9 [shape = 's32[1]{0}', space=sflag, size = 0x4, scoped, tag = 'scoped memory for tpu_custom_call.1']
    %10 = vsyncpa [#allocation3], 0
    %11 = vsyncpa [#allocation6], 0
    %12 = vsyncpa [#allocation4], 0
    %13 = vsyncpa [#allocation9], 0
    // Predicated region
    $region2: #{tpu_custom_call.1} parent=1 // pred_check
      _
    $region3: #{tpu_custom_call.1} parent=1 // pred_check_branch
      %15 = sbr.rel (0) target = $region5
    $region4: #{tpu_custom_call.1} parent=1 // pred_region
      %s17 = ssub.s32 128, 128
      %18 = vsyncadd [#allocation3], %s17
      %s20 = sshll.u32 [#allocation2], 4
      %s21 = int_to_ptr.vmem [resolvable:$true] %s20
      %23 = dma.hbm_to_vmem [thread:$0]  %s0, 128, %s21, [#allocation3]
    $region5: #{tpu_custom_call.1} parent=1 // pred_fallthru
      _
    // Predicated region
    $region6: #{tpu_custom_call.1} parent=1 // pred_check
      _
    $region7: #{tpu_custom_call.1} parent=1 // pred_check_branch
      %25 = sbr.rel (0) target = $region9
    $region8: #{tpu_custom_call.1} parent=1 // pred_region
      %s27 = ssub.s32 512, 512
      %28 = vsyncadd [#allocation6], %s27
      %s29 = sshll.u32 [#allocation5], 4
      %s30 = int_to_ptr.vmem [resolvable:$true] %s29
      %35 = dma.hbm_to_vmem [thread:$0]  %s1, 512, %s30, [#allocation6], 128, 128, 8
    $region9: #{tpu_custom_call.1} parent=1 // pred_fallthru
      _
    // Predicated region
    $region10: #{tpu_custom_call.1} parent=1 // pred_check
      _
    $region11: #{tpu_custom_call.1} parent=1 // pred_check_branch
      %37 = sbr.rel (0) target = $region13
    $region12: #{tpu_custom_call.1} parent=1 // pred_region
      _
    $region13: #{tpu_custom_call.1} parent=1 // pred_fallthru
      _
    // Predicated region
    $region14: #{tpu_custom_call.1} parent=1 // pred_check
      _
    $region15: #{tpu_custom_call.1} parent=1 // pred_check_branch
      %39 = sbr.rel (0) target = $region17
    $region16: #{tpu_custom_call.1} parent=1 // pred_region
      %40 = dma.done [#allocation3], 128
    $region17: #{tpu_custom_call.1} parent=1 // pred_fallthru
      _
    // Predicated region
    $region18: #{tpu_custom_call.1} parent=1 // pred_check
      _
    $region19: #{tpu_custom_call.1} parent=1 // pred_check_branch
      %42 = sbr.rel (0) target = $region21
    $region20: #{tpu_custom_call.1} parent=1 // pred_region
      %43 = dma.done [#allocation6], 512
    $region21: #{tpu_custom_call.1} parent=1 // pred_fallthru
      _
    %v45 = vld [vmem:[#allocation2] sm:$0xff]
    %v46 = vpack.c.bf16 %v45, %v45
    %v47 = vld [vmem:[#allocation5] sm:$0xff]
    %v48 = vld [vmem:[#allocation5 + $0x8] sm:$0xff]
    %v49 = vld [vmem:[#allocation5 + $0x10] sm:$0xff]
    %v50 = vld [vmem:[#allocation5 + $0x18] sm:$0xff]
    %v51 = vld [vmem:[%s2] sm:$0x3]
    %v53 = vlaneseq
    %v54 = vshrl.u32 %v53, 7
    %v55 = vsub.s32 0, %v54
    %v56 = vrot.slane %v51, %v55
    %v57 = vlaneseq
    %v58 = vshrl.u32 %v57, 7
    %v59 = vsub.s32 1, %v58
    %v60 = vrot.slane %v51, %v59
    %v67 = vunpack.c.l.b16 %v47
    %v68 = vunpack.c.h.b16 %v47
    %v69 = vunpack.c.l.b16 %v48
    %v70 = vunpack.c.h.b16 %v48
    %v71 = vunpack.c.l.b16 %v49
    %v72 = vunpack.c.h.b16 %v49
    %v73 = vunpack.c.l.b16 %v50
    %v74 = vunpack.c.h.b16 %v50
    %v75 = vpack.c.b16 %v69, %v67
    %v76 = vpack.c.b16 %v70, %v68
    %v77 = vpack.c.b16 %v73, %v71
    %v78 = vpack.c.b16 %v74, %v72
    %vm83 = vcmask 261120
    %v85 = vsel %vm83, %v46, 0
    %87 = vmatprep.subr.bf16.mxu0 %v76
    %88 = vmatpush1.bf16.msra.mxu0 %v75
    %89 = vmatprep.subr.bf16.mxu0 %v78
    %90 = vmatpush1.bf16.msra.mxu0 %v77
    %91 = vmatprep.subr.bf16.mxu0 0
    %92 = vmatpush1.bf16.msra.mxu0 0
    %93 = vmatprep.subr.bf16.mxu0 0
    %94 = vmatpush1.bf16.msra.mxu0 0
    %95 = vmatprep.subr.bf16.mxu0 0
    %96 = vmatpush1.bf16.msra.mxu0 0
    %97 = vmatprep.subr.bf16.mxu0 0
    %98 = vmatpush1.bf16.msra.mxu0 0
    %99 = vmatprep.subr.bf16.mxu0 0
    %100 = vmatpush1.bf16.msra.mxu0 0
    %101 = vmatprep.subr.bf16.mxu0 0
    %102 = vmatpush1.bf16.msra.mxu0 0
    %103 = vmatprep.subr.bf16.mxu0 0
    %104 = vmatpush1.bf16.msra.mxu0 0
    %105 = vmatprep.subr.bf16.mxu0 0
    %106 = vmatpush1.bf16.msra.mxu0 0
    %107 = vmatprep.subr.bf16.mxu0 0
    %108 = vmatpush1.bf16.msra.mxu0 0
    %109 = vmatprep.subr.bf16.mxu0 0
    %110 = vmatpush1.bf16.msra.mxu0 0
    %111 = vmatprep.subr.bf16.mxu0 0
    %112 = vmatpush1.bf16.msra.mxu0 0
    %113 = vmatprep.subr.bf16.mxu0 0
    %114 = vmatpush1.bf16.msra.mxu0 0
    %115 = vmatprep.subr.bf16.mxu0 0
    %116 = vmatpush1.bf16.msra.mxu0 0
    %117 = vmatprep.subr.bf16.mxu0 0
    %118 = vmatpush1.bf16.msra.mxu0 0
    %119 = vmatprep.mubr.bf16.mxu0 0
    %120 = vmatmul.mubr.bf16.gmra.mrb[0].mxu0 %v85
    %v121 = vpop.f32.mrb[0].mxu0
    %v122 = vadd.f32 %v56, %v121
    %v123 = vpop.f32.mrb[0].mxu0
    %v124 = vadd.f32 %v60, %v123
    %v125 = vpop.f32.mrb[0].mxu0
    %v126 = vpop.f32.mrb[0].mxu0
    %127 = vdwg.mxu0
    %128 = vst [vmem:[#allocation7] sm:$0xff] %v122
    %129 = vst [vmem:[#allocation8] sm:$0xff] %v124
    // Predicated region
    $region22: #{tpu_custom_call.1} parent=1 // pred_check
      _
    $region23: #{tpu_custom_call.1} parent=1 // pred_check_branch
      %131 = sbr.rel (0) target = $region25
    $region24: #{tpu_custom_call.1} parent=1 // pred_region
      %s133 = ssub.s32 128, 128
      %134 = vsyncadd [#allocation4], %s133
      %s136 = sshll.u32 [#allocation7], 4
      %s137 = int_to_ptr.vmem [resolvable:$true] %s136
      %139 = dma.vmem_to_hbm [thread:$0]  %s137, 128, %s3, [#allocation4]
    $region25: #{tpu_custom_call.1} parent=1 // pred_fallthru
      _
    // Predicated region
    $region26: #{tpu_custom_call.1} parent=1 // pred_check
      _
    $region27: #{tpu_custom_call.1} parent=1 // pred_check_branch
      %141 = sbr.rel (0) target = $region29
    $region28: #{tpu_custom_call.1} parent=1 // pred_region
      %s143 = ssub.s32 128, 128
      %144 = vsyncadd [#allocation9], %s143
      %s146 = sshll.u32 [#allocation8], 4
      %s147 = int_to_ptr.vmem [resolvable:$true] %s146
      %149 = dma.vmem_to_hbm [thread:$0]  %s147, 128, %s4, [#allocation9]
    $region29: #{tpu_custom_call.1} parent=1 // pred_fallthru
      _
    // Predicated region
    $region30: #{tpu_custom_call.1} parent=1 // pred_check
      _
    $region31: #{tpu_custom_call.1} parent=1 // pred_check_branch
      %151 = sbr.rel (0) target = $region33
    $region32: #{tpu_custom_call.1} parent=1 // pred_region
      %152 = dma.done [#allocation4], 128
    $region33: #{tpu_custom_call.1} parent=1 // pred_fallthru
      _
    // Predicated region
    $region34: #{tpu_custom_call.1} parent=1 // pred_check
      _
    $region35: #{tpu_custom_call.1} parent=1 // pred_check_branch
      %154 = sbr.rel (0) target = $region37
    $region36: #{tpu_custom_call.1} parent=1 // pred_region
      %155 = dma.done [#allocation9], 128
    $region37: #{tpu_custom_call.1} parent=1 // pred_fallthru
      _
    %156 = vsyncpa [#allocation3], 1
    %157 = vsyncpa [#allocation6], 1
    %158 = vsyncpa [#allocation4], 1
    %159 = vsyncpa [#allocation9], 1

</llo_original>
